<compile_context>
chip_gen: v6e
topology: v6e:2x2x1
jax: 0.10.0
libtpu: 0.0.40
codegen_flags: <defaults>
</compile_context>

<pallas_src>
import functools

import jax
import jax.numpy as jnp
import numpy as np
from jax.experimental import pallas as pl
from jax.experimental.pallas import tpu as pltpu

_EPS = 1e-8  # torch.nn.CosineSimilarity default eps


def _round_up(x, m):
    return ((x + m - 1) // m) * m


def _movie_genre_kernel(mids_ref, gids_ref,     # (1, TB) int32 ids (lanes = batch)
                        tab_ref,                # (2D, Lm_pad+Lg_pad) f32 block-diag table
                        w_ref, b_ref,           # (1, 1) f32 Linear(1,1) params (SMEM)
                        o_ref,                  # (1, TB) f32 output block
                        *, emb_dim, movie_cols):
    tb = mids_ref.shape[-1]
    lt = tab_ref.shape[-1]                      # Lm_pad + Lg_pad

    mids = mids_ref[...]                        # (1, TB)
    gids = gids_ref[...] + movie_cols           # genre rows live after the movie block

    # One combined one-hot, batch on lanes: rows [0, Lm_pad) select the movie
    # row, rows [Lm_pad, Lt) select the shifted genre row.  Single iota, two
    # compares, one OR -- only one (Lt, TB) operand is ever materialized.
    iota = jax.lax.broadcasted_iota(jnp.int32, (lt, tb), 0)
    oh = ((iota == mids) | (iota == gids)).astype(jnp.float32)

    # One block-diagonal MXU gather: (2D, Lt) @ (Lt, TB) -> (2D, TB).
    # Rows [0, D) = normalized movie embedding, rows [D, 2D) = normalized genre.
    emb = jnp.dot(tab_ref[...], oh, preferred_element_type=jnp.float32)

    # Tables are pre-normalized, so cosine similarity == plain dot product
    # (single sublane reduction -> (1, TB)).
    cos = jnp.sum(emb[:emb_dim, :] * emb[emb_dim:, :], axis=0, keepdims=True)

    # Linear(1,1) + sigmoid, written as a lane-dense (1, TB) block.
    o_ref[...] = jax.nn.sigmoid(cos * w_ref[0, 0] + b_ref[0, 0])


@functools.partial(jax.jit, static_argnames=("block_rows",))
def movie_genre_embedding_forward(x, m_table, g_table, fc_w, fc_b, *, block_rows=1024):
    """x: (B, 2) int [movie_id, genre_id]; m_table: (Lm, D) f32; g_table: (Lg, D) f32;
    fc_w, fc_b: (1, 1) f32.  Returns (B, 1) f32."""
    B = x.shape[0]
    Lm, D = m_table.shape
    Lg = g_table.shape[0]

    assert block_rows % 128 == 0
    b128 = _round_up(B, 128)
    tb = min(block_rows, b128)                  # batch lanes per grid step
    if b128 >= 2 * 128:
        # Guarantee >= 2 grid steps so the "parallel" batch axis can be split
        # across v7x's two TensorCores.
        tb = min(tb, _round_up((b128 + 1) // 2, 128))
    b_pad = _round_up(b128, tb)
    n_blocks = b_pad // tb

    # Batch ids as a lane-dense (1, B_pad) row (padded lanes gather row 0 and
    # are sliced off before returning).
    mids = jnp.zeros((1, b_pad), jnp.int32).at[0, :B].set(x[:, 0].astype(jnp.int32))
    gids = jnp.zeros((1, b_pad), jnp.int32).at[0, :B].set(x[:, 1].astype(jnp.int32))

    # L2-normalize both tables host-side so the kernel cosine is a plain dot.
    # (Per-row clamp max(|row|, eps) differs from torch's max(|m|*|g|, eps)
    # only for near-zero-norm rows.)
    m_hat = m_table.astype(jnp.float32)
    m_hat = m_hat / jnp.maximum(jnp.linalg.norm(m_hat, axis=1, keepdims=True), _EPS)
    g_hat = g_table.astype(jnp.float32)
    g_hat = g_hat / jnp.maximum(jnp.linalg.norm(g_hat, axis=1, keepdims=True), _EPS)

    # Block-diagonal transposed table: (2D, Lm_pad + Lg_pad), f32.
    #   top-left  (D, Lm)  = m_hat.T
    #   bottom-right (D, Lg) = g_hat.T
    # Zero off-diagonal blocks make the fused one-hot matmul an exact
    # per-half row selection.
    lm_pad = _round_up(Lm, 128)
    lg_pad = _round_up(Lg, 128)
    lt_pad = lm_pad + lg_pad
    tab_t = jnp.zeros((2 * D, lt_pad), jnp.float32)
    tab_t = tab_t.at[:D, :Lm].set(m_hat.T)
    tab_t = tab_t.at[D:, lm_pad:lm_pad + Lg].set(g_hat.T)

    kernel = functools.partial(_movie_genre_kernel, emb_dim=D, movie_cols=lm_pad)

    grid_spec = pltpu.PrefetchScalarGridSpec(
        num_scalar_prefetch=0,
        grid=(n_blocks,),
        in_specs=[
            # id rows: one lane-dense (1, TB) block per grid step.
            pl.BlockSpec((1, tb), lambda i: (0, i)),
            pl.BlockSpec((1, tb), lambda i: (0, i)),
            # Fused table resident in VMEM (constant block across the grid).
            pl.BlockSpec((2 * D, lt_pad), lambda i: (0, 0)),
            # Linear(1,1) weight / bias as SMEM scalars.
            pl.BlockSpec(memory_space=pltpu.SMEM),
            pl.BlockSpec(memory_space=pltpu.SMEM),
        ],
        # Blocked, lane-dense output: each grid step owns its own (1, TB) block.
        out_specs=pl.BlockSpec((1, tb), lambda i: (0, i)),
    )

    out_row = pl.pallas_call(
        kernel,
        out_shape=jax.ShapeDtypeStruct((1, b_pad), jnp.float32),
        grid_spec=grid_spec,
        compiler_params=pltpu.CompilerParams(
            # Independent output blocks -> batch axis sharded across TCs (v7x).
            dimension_semantics=("parallel",),
        ),
    )(mids, gids, tab_t, fc_w.astype(jnp.float32), fc_b.astype(jnp.float32))

    return out_row[0, :B].reshape(B, 1)


def _reference_forward(x, m_table, g_table, fc_w, fc_b):
    # Exact PyTorch formulation: cos = <m,g> / max(||m||*||g||, eps).
    memb = m_table[x[:, 0]]
    gemb = g_table[x[:, 1]]
    dot = jnp.sum(memb * gemb, axis=1, keepdims=True)
    denom = jnp.maximum(
        jnp.linalg.norm(memb, axis=1, keepdims=True)
        * jnp.linalg.norm(gemb, axis=1, keepdims=True), _EPS)
    return jax.nn.sigmoid((dot / denom) * fc_w[0, 0] + fc_b[0, 0])


if __name__ == "__main__":
    # Small, forward-consistent shapes.
    LEN_MOVIES = 64
    LEN_GENRES = 16
    EMBEDDING_DIM = 128

    key = jax.random.PRNGKey(0)
    k_m, k_g, k_w, k_b, k_x = jax.random.split(key, 5)

    # Deterministic synthetic parameters (nn.Embedding ~ N(0,1); Linear(1,1) small uniform).
    m_table = jax.random.normal(k_m, (LEN_MOVIES, EMBEDDING_DIM), dtype=jnp.float32)
    g_table = jax.random.normal(k_g, (LEN_GENRES, EMBEDDING_DIM), dtype=jnp.float32)
    fc_w = jax.random.uniform(k_w, (1, 1), dtype=jnp.float32, minval=-1.0, maxval=1.0)
    fc_b = jax.random.uniform(k_b, (1, 1), dtype=jnp.float32, minval=-1.0, maxval=1.0)

    # Two batch sizes: tiny (1 grid step) and one that exercises lane padding
    # plus the >=2-grid-step (two TensorCore) path.
    for batch in (8, 300):
        k_x, k_xm, k_xg = jax.random.split(k_x, 3)
        movie_idx = jax.random.randint(k_xm, (batch,), 0, LEN_MOVIES, dtype=jnp.int32)
        genre_idx = jax.random.randint(k_xg, (batch,), 0, LEN_GENRES, dtype=jnp.int32)
        x = jnp.stack([movie_idx, genre_idx], axis=1)

        out = movie_genre_embedding_forward(x, m_table, g_table, fc_w, fc_b)
        out = jax.block_until_ready(out)

        ref = _reference_forward(x, m_table, g_table, fc_w, fc_b)
        np.testing.assert_allclose(np.asarray(out), np.asarray(ref), atol=1e-5, rtol=1e-4)
        assert out.shape == (batch, 1)

    print("KERNEL_OK")
</pallas_src>

<mosaic_0001>
module attributes {stable_mosaic.version = 11 : i64} {
  func.func @_movie_genre_kernel(%arg0: i32, %arg1: memref<1x128xi32, #tpu.memory_space<vmem>>, %arg2: memref<1x128xi32, #tpu.memory_space<vmem>>, %arg3: memref<256x256xf32, #tpu.memory_space<vmem>>, %arg4: memref<1x1xf32, #tpu.memory_space<smem>>, %arg5: memref<1x1xf32, #tpu.memory_space<smem>>, %arg6: memref<1x128xf32, #tpu.memory_space<vmem>>) attributes {dimension_semantics = [#tpu.dimension_semantics<parallel>], iteration_bounds = array<i64: 1>, scalar_prefetch = 0 : i64, scratch_operands = 0 : i64, tpu.core_type = #tpu.core_type<tc>, window_params = [{transform_indices = @transform_0, window_bounds = array<i64: 1, 128>}, {transform_indices = @transform_1, window_bounds = array<i64: 1, 128>}, {pipeline_mode = #tpu.pipeline_mode<synchronous>, transform_indices = @transform_2, window_bounds = array<i64: 256, 256>}, {transform_indices = @transform_3, window_bounds = array<i64: 1, 1>}, {transform_indices = @transform_4, window_bounds = array<i64: 1, 1>}, {transform_indices = @transform_5, window_bounds = array<i64: 1, 128>}]} {
    %c0 = arith.constant 0 : index
    %c0_0 = arith.constant 0 : index
    %0 = vector.load %arg1[%c0, %c0_0] : memref<1x128xi32, #tpu.memory_space<vmem>>, vector<1x128xi32>
    %c0_1 = arith.constant 0 : index
    %c0_2 = arith.constant 0 : index
    %1 = vector.load %arg2[%c0_1, %c0_2] : memref<1x128xi32, #tpu.memory_space<vmem>>, vector<1x128xi32>
    %c128_i32 = arith.constant 128 : i32
    %2 = vector.broadcast %c128_i32 : i32 to vector<1x128xi32>
    %3 = arith.addi %1, %2 : vector<1x128xi32>
    %4 = tpu.iota {dimensions = array<i32: 0>} : vector<256x128xi32>
    %5 = vector.broadcast %0 : vector<1x128xi32> to vector<256x128xi32>
    %6 = arith.cmpi eq, %4, %5 : vector<256x128xi32>
    %7 = vector.broadcast %3 : vector<1x128xi32> to vector<256x128xi32>
    %8 = arith.cmpi eq, %4, %7 : vector<256x128xi32>
    %9 = arith.ori %6, %8 : vector<256x128xi1>
    %10 = arith.extui %9 : vector<256x128xi1> to vector<256x128xi32>
    %11 = arith.sitofp %10 : vector<256x128xi32> to vector<256x128xf32>
    %c0_3 = arith.constant 0 : index
    %c0_4 = arith.constant 0 : index
    %12 = vector.load %arg3[%c0_3, %c0_4] : memref<256x256xf32, #tpu.memory_space<vmem>>, vector<256x256xf32>
    %cst = arith.constant dense<0.000000e+00> : vector<256x128xf32>
    %13 = tpu.matmul %12, %11, %cst {dimension_numbers = #tpu.dot_dimension_numbers<[1], [0], [0], [1], [0, 0, 1, 1], [], []>} : vector<256x256xf32>, vector<256x128xf32>, vector<256x128xf32> -> vector<256x128xf32>
    %14 = vector.extract_strided_slice %13 {offsets = [0, 0], sizes = [128, 128], strides = [1, 1]} : vector<256x128xf32> to vector<128x128xf32>
    %15 = vector.extract_strided_slice %13 {offsets = [128, 0], sizes = [128, 128], strides = [1, 1]} : vector<256x128xf32> to vector<128x128xf32>
    %16 = arith.mulf %14, %15 : vector<128x128xf32>
    %cst_5 = arith.constant dense<0.000000e+00> : vector<128xf32>
    %17 = vector.multi_reduction <add>, %16, %cst_5 [0] : vector<128x128xf32> to vector<128xf32>
    %18 = vector.shape_cast %17 : vector<128xf32> to vector<1x128xf32>
    %c0_6 = arith.constant 0 : index
    %c0_7 = arith.constant 0 : index
    %19 = memref.load %arg4[%c0_6, %c0_7] : memref<1x1xf32, #tpu.memory_space<smem>>
    %20 = vector.broadcast %19 : f32 to vector<1x128xf32>
    %21 = arith.mulf %18, %20 : vector<1x128xf32>
    %c0_8 = arith.constant 0 : index
    %c0_9 = arith.constant 0 : index
    %22 = memref.load %arg5[%c0_8, %c0_9] : memref<1x1xf32, #tpu.memory_space<smem>>
    %23 = vector.broadcast %22 : f32 to vector<1x128xf32>
    %24 = arith.addf %21, %23 : vector<1x128xf32>
    %25 = arith.negf %24 : vector<1x128xf32>
    %26 = math.exp %25 : vector<1x128xf32>
    %cst_10 = arith.constant 1.000000e+00 : f32
    %27 = vector.broadcast %cst_10 : f32 to vector<1x128xf32>
    %28 = arith.addf %27, %26 : vector<1x128xf32>
    %29 = arith.divf %27, %28 : vector<1x128xf32>
    %c0_11 = arith.constant 0 : index
    %c0_12 = arith.constant 0 : index
    %30 = vector.load %arg6[%c0_11, %c0_12] : memref<1x128xf32, #tpu.memory_space<vmem>>, vector<1x128xf32>
    tpu.vector_store %arg6[%c0_11, %c0_12], %29 {strides = array<i32>} : memref<1x128xf32, #tpu.memory_space<vmem>>, vector<1x128xf32>,
    return
  }
  func.func @transform_0(%arg0: i32) -> (i32, i32) {
    %c0_i32 = arith.constant 0 : i32
    %c0_i32_0 = arith.constant 0 : i32
    return %c0_i32, %arg0 : i32, i32
  }
  func.func @transform_1(%arg0: i32) -> (i32, i32) {
    %c0_i32 = arith.constant 0 : i32
    %c0_i32_0 = arith.constant 0 : i32
    return %c0_i32, %arg0 : i32, i32
  }
  func.func @transform_2(%arg0: i32) -> (i32, i32) {
    %c0_i32 = arith.constant 0 : i32
    %c0_i32_0 = arith.constant 0 : i32
    %c0_i32_1 = arith.constant 0 : i32
    return %c0_i32, %c0_i32_0 : i32, i32
  }
  func.func @transform_3(%arg0: i32) -> (i32, i32) {
    %c0_i32 = arith.constant 0 : i32
    %c0_i32_0 = arith.constant 0 : i32
    %c0_i32_1 = arith.constant 0 : i32
    return %c0_i32, %c0_i32_0 : i32, i32
  }
  func.func @transform_4(%arg0: i32) -> (i32, i32) {
    %c0_i32 = arith.constant 0 : i32
    %c0_i32_0 = arith.constant 0 : i32
    %c0_i32_1 = arith.constant 0 : i32
    return %c0_i32, %c0_i32_0 : i32, i32
  }
  func.func @transform_5(%arg0: i32) -> (i32, i32) {
    %c0_i32 = arith.constant 0 : i32
    %c0_i32_0 = arith.constant 0 : i32
    return %c0_i32, %arg0 : i32, i32
  }
}

</mosaic_0001>

<llo_original>
// kernel: movie_genre_embedding_forward.1
$region0: #{movie_genre_embedding_forward.1}
  #allocation0 [shape = 'u32[]', space=smem, size = 0x4, offset = 0x4, fixed_abs, tag = 'smem constant byte address 0x4 - core index']
  #allocation1 [shape = 'u32[144,128]{1,0:T(1,128)}', space=vmem, size = 0x12000, scoped, tag = 'internal scratch']
  #allocation2 [shape = 'f32[1,1]{1,0:T(1,128)S(6)}', space=smem, size = 0x200, scoped, tag = 'scoped memory for movie_genre_embedding_forward.1']
  #allocation3 [shape = 'f32[1,1]{1,0:T(1,128)S(6)}', space=smem, size = 0x200, scoped, tag = 'scoped memory for movie_genre_embedding_forward.1']
  %s0 = inlined_call_operand.vmem [shape: s32[1,128], index: 0, kind: input, shape index: {}]
  %s1 = inlined_call_operand.vmem [shape: s32[1,128], index: 1, kind: input, shape index: {}]
  %s2 = inlined_call_operand.vmem [shape: f32[256,256], index: 2, kind: input, shape index: {}]
  %s3 = inlined_call_operand.<no memory space> [shape: f32[1,1], index: 3, kind: input, shape index: {}]
  %s4 = inlined_call_operand.<no memory space> [shape: f32[1,1], index: 4, kind: input, shape index: {}]
  %s5 = inlined_call_operand.vmem [shape: f32[1,128], index: 5, kind: output, shape index: {}]
  %s6 = sld [smem:[#allocation0]]
  $region30: #{movie_genre_embedding_forward.1} parent=0
    _
  %s8 = ssub.s32 1, %s6
  %s9 = scalar_select 0, %s8, %s6
  %10 = sst [smem:[#allocation2]] %s3
  %11 = sst [smem:[#allocation3]] %s4
  // Predicated region
  $region2: #{movie_genre_embedding_forward.1} parent=0 // pred_check
    _
  $region3: #{movie_genre_embedding_forward.1} parent=0 // pred_check_branch
    %13 = sbr.rel (0) target = $region5
  $region4: #{movie_genre_embedding_forward.1} parent=0 // pred_region
    _
  $region5: #{movie_genre_embedding_forward.1} parent=0 // pred_fallthru
    _
  // Predicated region
  $region6: #{movie_genre_embedding_forward.1} parent=0 // pred_check
    _
  $region7: #{movie_genre_embedding_forward.1} parent=0 // pred_check_branch
    %15 = sbr.rel (0) target = $region9
  $region8: #{movie_genre_embedding_forward.1} parent=0 // pred_region
    _
  $region9: #{movie_genre_embedding_forward.1} parent=0 // pred_fallthru
    _
  // Predicated region
  $region10: #{movie_genre_embedding_forward.1} parent=0 // pred_check
    _
  $region11: #{movie_genre_embedding_forward.1} parent=0 // pred_check_branch
    %17 = sbr.rel (0) target = $region13
  $region12: #{movie_genre_embedding_forward.1} parent=0 // pred_region
    _
  $region13: #{movie_genre_embedding_forward.1} parent=0 // pred_fallthru
    _
  // Predicated region
  $region14: #{movie_genre_embedding_forward.1} parent=0 // pred_check
    _
  $region15: #{movie_genre_embedding_forward.1} parent=0 // pred_check_branch
    %19 = sbr.rel (0) target = $region17
  $region16: #{movie_genre_embedding_forward.1} parent=0 // pred_region
    _
  $region17: #{movie_genre_embedding_forward.1} parent=0 // pred_fallthru
    _
  // Predicated region
  $region18: #{movie_genre_embedding_forward.1} parent=0 // pred_check
    _
  $region19: #{movie_genre_embedding_forward.1} parent=0 // pred_check_branch
    %21 = sbr.rel (0) target = $region21
  $region20: #{movie_genre_embedding_forward.1} parent=0 // pred_region
    _
  $region21: #{movie_genre_embedding_forward.1} parent=0 // pred_fallthru
    _
  %v22 = vld [vmem:[%s0] sm:$0x1]
  %v23 = vld [vmem:[%s1] sm:$0x1]
  %v24 = vadd.s32 %v23, 128
  %v25 = vlaneseq
  %v26 = vshrl.u32 %v25, 7
  %v27 = vadd.s32 %v26, 8
  %v28 = vadd.s32 %v26, 16
  %v29 = vadd.s32 %v26, 24
  %v30 = vadd.s32 %v26, 32
  %v31 = vadd.s32 %v26, 40
  %v32 = vadd.s32 %v26, 48
  %v33 = vadd.s32 %v26, 56
  %v34 = vadd.s32 %v26, 64
  %v35 = vadd.s32 %v26, 72
  %v36 = vadd.s32 %v26, 80
  %v37 = vadd.s32 %v26, 88
  %v38 = vadd.s32 %v26, 96
  %v39 = vadd.s32 %v26, 104
  %v40 = vadd.s32 %v26, 112
  %v41 = vadd.s32 %v26, 120
  %v42 = vadd.s32 %v26, 128
  %v43 = vadd.s32 %v26, 136
  %v44 = vadd.s32 %v26, 144
  %v45 = vadd.s32 %v26, 152
  %v46 = vadd.s32 %v26, 160
  %v47 = vadd.s32 %v26, 168
  %v48 = vadd.s32 %v26, 176
  %v49 = vadd.s32 %v26, 184
  %v50 = vadd.s32 %v26, 192
  %v51 = vadd.s32 %v26, 200
  %v52 = vadd.s32 %v26, 208
  %v53 = vadd.s32 %v26, 216
  %v54 = vadd.s32 %v26, 224
  %v55 = vadd.s32 %v26, 232
  %v56 = vadd.s32 %v26, 240
  %v57 = vadd.s32 %v26, 248
  %v58 = vlaneseq
  %v59 = vshrl.u32 %v58, 7
  %v60 = vsub.s32 0, %v59
  %v61 = vrot.slane %v22, %v60
  %vm62 = vcmp.eq.s32.totalorder %v26, %v61
  %vm63 = vcmp.eq.s32.totalorder %v27, %v61
  %vm64 = vcmp.eq.s32.totalorder %v28, %v61
  %vm65 = vcmp.eq.s32.totalorder %v29, %v61
  %vm66 = vcmp.eq.s32.totalorder %v30, %v61
  %vm67 = vcmp.eq.s32.totalorder %v31, %v61
  %vm68 = vcmp.eq.s32.totalorder %v32, %v61
  %vm69 = vcmp.eq.s32.totalorder %v33, %v61
  %vm70 = vcmp.eq.s32.totalorder %v34, %v61
  %vm71 = vcmp.eq.s32.totalorder %v35, %v61
  %vm72 = vcmp.eq.s32.totalorder %v36, %v61
  %vm73 = vcmp.eq.s32.totalorder %v37, %v61
  %vm74 = vcmp.eq.s32.totalorder %v38, %v61
  %vm75 = vcmp.eq.s32.totalorder %v39, %v61
  %vm76 = vcmp.eq.s32.totalorder %v40, %v61
  %vm77 = vcmp.eq.s32.totalorder %v41, %v61
  %vm78 = vcmp.eq.s32.totalorder %v42, %v61
  %vm79 = vcmp.eq.s32.totalorder %v43, %v61
  %vm80 = vcmp.eq.s32.totalorder %v44, %v61
  %vm81 = vcmp.eq.s32.totalorder %v45, %v61
  %vm82 = vcmp.eq.s32.totalorder %v46, %v61
  %vm83 = vcmp.eq.s32.totalorder %v47, %v61
  %vm84 = vcmp.eq.s32.totalorder %v48, %v61
  %vm85 = vcmp.eq.s32.totalorder %v49, %v61
  %vm86 = vcmp.eq.s32.totalorder %v50, %v61
  %vm87 = vcmp.eq.s32.totalorder %v51, %v61
  %vm88 = vcmp.eq.s32.totalorder %v52, %v61
  %vm89 = vcmp.eq.s32.totalorder %v53, %v61
  %vm90 = vcmp.eq.s32.totalorder %v54, %v61
  %vm91 = vcmp.eq.s32.totalorder %v55, %v61
  %vm92 = vcmp.eq.s32.totalorder %v56, %v61
  %vm93 = vcmp.eq.s32.totalorder %v57, %v61
  %v94 = vlaneseq
  %v95 = vshrl.u32 %v94, 7
  %v96 = vsub.s32 0, %v95
  %v97 = vrot.slane %v24, %v96
  %vm98 = vcmp.eq.s32.totalorder %v26, %v97
  %vm99 = vcmp.eq.s32.totalorder %v27, %v97
  %vm100 = vcmp.eq.s32.totalorder %v28, %v97
  %vm101 = vcmp.eq.s32.totalorder %v29, %v97
  %vm102 = vcmp.eq.s32.totalorder %v30, %v97
  %vm103 = vcmp.eq.s32.totalorder %v31, %v97
  %vm104 = vcmp.eq.s32.totalorder %v32, %v97
  %vm105 = vcmp.eq.s32.totalorder %v33, %v97
  %vm106 = vcmp.eq.s32.totalorder %v34, %v97
  %vm107 = vcmp.eq.s32.totalorder %v35, %v97
  %vm108 = vcmp.eq.s32.totalorder %v36, %v97
  %vm109 = vcmp.eq.s32.totalorder %v37, %v97
  %vm110 = vcmp.eq.s32.totalorder %v38, %v97
  %vm111 = vcmp.eq.s32.totalorder %v39, %v97
  %vm112 = vcmp.eq.s32.totalorder %v40, %v97
  %vm113 = vcmp.eq.s32.totalorder %v41, %v97
  %vm114 = vcmp.eq.s32.totalorder %v42, %v97
  %vm115 = vcmp.eq.s32.totalorder %v43, %v97
  %vm116 = vcmp.eq.s32.totalorder %v44, %v97
  %vm117 = vcmp.eq.s32.totalorder %v45, %v97
  %vm118 = vcmp.eq.s32.totalorder %v46, %v97
  %vm119 = vcmp.eq.s32.totalorder %v47, %v97
  %vm120 = vcmp.eq.s32.totalorder %v48, %v97
  %vm121 = vcmp.eq.s32.totalorder %v49, %v97
  %vm122 = vcmp.eq.s32.totalorder %v50, %v97
  %vm123 = vcmp.eq.s32.totalorder %v51, %v97
  %vm124 = vcmp.eq.s32.totalorder %v52, %v97
  %vm125 = vcmp.eq.s32.totalorder %v53, %v97
  %vm126 = vcmp.eq.s32.totalorder %v54, %v97
  %vm127 = vcmp.eq.s32.totalorder %v55, %v97
  %vm128 = vcmp.eq.s32.totalorder %v56, %v97
  %vm129 = vcmp.eq.s32.totalorder %v57, %v97
  %vm130 = vmor %vm62, %vm98
  %vm131 = vmor %vm63, %vm99
  %vm132 = vmor %vm64, %vm100
  %vm133 = vmor %vm65, %vm101
  %vm134 = vmor %vm66, %vm102
  %vm135 = vmor %vm67, %vm103
  %vm136 = vmor %vm68, %vm104
  %vm137 = vmor %vm69, %vm105
  %vm138 = vmor %vm70, %vm106
  %vm139 = vmor %vm71, %vm107
  %vm140 = vmor %vm72, %vm108
  %vm141 = vmor %vm73, %vm109
  %vm142 = vmor %vm74, %vm110
  %vm143 = vmor %vm75, %vm111
  %vm144 = vmor %vm76, %vm112
  %vm145 = vmor %vm77, %vm113
  %vm146 = vmor %vm78, %vm114
  %vm147 = vmor %vm79, %vm115
  %vm148 = vmor %vm80, %vm116
  %vm149 = vmor %vm81, %vm117
  %vm150 = vmor %vm82, %vm118
  %vm151 = vmor %vm83, %vm119
  %vm152 = vmor %vm84, %vm120
  %vm153 = vmor %vm85, %vm121
  %vm154 = vmor %vm86, %vm122
  %vm155 = vmor %vm87, %vm123
  %vm156 = vmor %vm88, %vm124
  %vm157 = vmor %vm89, %vm125
  %vm158 = vmor %vm90, %vm126
  %vm159 = vmor %vm91, %vm127
  %vm160 = vmor %vm92, %vm128
  %vm161 = vmor %vm93, %vm129
  %v162 = vsel %vm130, 1, 0
  %v163 = vsel %vm131, 1, 0
  %v164 = vsel %vm132, 1, 0
  %v165 = vsel %vm133, 1, 0
  %v166 = vsel %vm134, 1, 0
  %v167 = vsel %vm135, 1, 0
  %v168 = vsel %vm136, 1, 0
  %v169 = vsel %vm137, 1, 0
  %v170 = vsel %vm138, 1, 0
  %v171 = vsel %vm139, 1, 0
  %v172 = vsel %vm140, 1, 0
  %v173 = vsel %vm141, 1, 0
  %v174 = vsel %vm142, 1, 0
  %v175 = vsel %vm143, 1, 0
  %v176 = vsel %vm144, 1, 0
  %v177 = vsel %vm145, 1, 0
  %v178 = vsel %vm146, 1, 0
  %v179 = vsel %vm147, 1, 0
  %v180 = vsel %vm148, 1, 0
  %v181 = vsel %vm149, 1, 0
  %v182 = vsel %vm150, 1, 0
  %v183 = vsel %vm151, 1, 0
  %v184 = vsel %vm152, 1, 0
  %v185 = vsel %vm153, 1, 0
  %v186 = vsel %vm154, 1, 0
  %v187 = vsel %vm155, 1, 0
  %v188 = vsel %vm156, 1, 0
  %v189 = vsel %vm157, 1, 0
  %v190 = vsel %vm158, 1, 0
  %v191 = vsel %vm159, 1, 0
  %v192 = vsel %vm160, 1, 0
  %v193 = vsel %vm161, 1, 0
  %v194 = vcvt.s32.f32 %v162
  %v195 = vcvt.s32.f32 %v163
  %v196 = vcvt.s32.f32 %v164
  %v197 = vcvt.s32.f32 %v165
  %v198 = vcvt.s32.f32 %v166
  %v199 = vcvt.s32.f32 %v167
  %v200 = vcvt.s32.f32 %v168
  %v201 = vcvt.s32.f32 %v169
  %v202 = vcvt.s32.f32 %v170
  %v203 = vcvt.s32.f32 %v171
  %v204 = vcvt.s32.f32 %v172
  %v205 = vcvt.s32.f32 %v173
  %v206 = vcvt.s32.f32 %v174
  %v207 = vcvt.s32.f32 %v175
  %v208 = vcvt.s32.f32 %v176
  %v209 = vcvt.s32.f32 %v177
  %v210 = vcvt.s32.f32 %v178
  %v211 = vcvt.s32.f32 %v179
  %v212 = vcvt.s32.f32 %v180
  %v213 = vcvt.s32.f32 %v181
  %v214 = vcvt.s32.f32 %v182
  %v215 = vcvt.s32.f32 %v183
  %v216 = vcvt.s32.f32 %v184
  %v217 = vcvt.s32.f32 %v185
  %v218 = vcvt.s32.f32 %v186
  %v219 = vcvt.s32.f32 %v187
  %v220 = vcvt.s32.f32 %v188
  %v221 = vcvt.s32.f32 %v189
  %v222 = vcvt.s32.f32 %v190
  %v223 = vcvt.s32.f32 %v191
  %v224 = vcvt.s32.f32 %v192
  %v225 = vcvt.s32.f32 %v193
  %v226 = vld [vmem:[%s2] sm:$0xff]
  %v227 = vld [vmem:[%s2 + $0x8] sm:$0xff]
  %v228 = vld [vmem:[%s2 + $0x10] sm:$0xff]
  %v229 = vld [vmem:[%s2 + $0x18] sm:$0xff]
  %v230 = vld [vmem:[%s2 + $0x20] sm:$0xff]
  %v231 = vld [vmem:[%s2 + $0x28] sm:$0xff]
  %v232 = vld [vmem:[%s2 + $0x30] sm:$0xff]
  %v233 = vld [vmem:[%s2 + $0x38] sm:$0xff]
  %v234 = vld [vmem:[%s2 + $0x40] sm:$0xff]
  %v235 = vld [vmem:[%s2 + $0x48] sm:$0xff]
  %v236 = vld [vmem:[%s2 + $0x50] sm:$0xff]
  %v237 = vld [vmem:[%s2 + $0x58] sm:$0xff]
  %v238 = vld [vmem:[%s2 + $0x60] sm:$0xff]
  %v239 = vld [vmem:[%s2 + $0x68] sm:$0xff]
  %v240 = vld [vmem:[%s2 + $0x70] sm:$0xff]
  %v241 = vld [vmem:[%s2 + $0x78] sm:$0xff]
  %v242 = vld [vmem:[%s2 + $0x80] sm:$0xff]
  %v243 = vld [vmem:[%s2 + $0x88] sm:$0xff]
  %v244 = vld [vmem:[%s2 + $0x90] sm:$0xff]
  %v245 = vld [vmem:[%s2 + $0x98] sm:$0xff]
  %v246 = vld [vmem:[%s2 + $0xa0] sm:$0xff]
  %v247 = vld [vmem:[%s2 + $0xa8] sm:$0xff]
  %v248 = vld [vmem:[%s2 + $0xb0] sm:$0xff]
  %v249 = vld [vmem:[%s2 + $0xb8] sm:$0xff]
  %v250 = vld [vmem:[%s2 + $0xc0] sm:$0xff]
  %v251 = vld [vmem:[%s2 + $0xc8] sm:$0xff]
  %v252 = vld [vmem:[%s2 + $0xd0] sm:$0xff]
  %v253 = vld [vmem:[%s2 + $0xd8] sm:$0xff]
  %v254 = vld [vmem:[%s2 + $0xe0] sm:$0xff]
  %v255 = vld [vmem:[%s2 + $0xe8] sm:$0xff]
  %v256 = vld [vmem:[%s2 + $0xf0] sm:$0xff]
  %v257 = vld [vmem:[%s2 + $0xf8] sm:$0xff]
  %v258 = vld [vmem:[%s2 + $0x100] sm:$0xff]
  %v259 = vld [vmem:[%s2 + $0x108] sm:$0xff]
  %v260 = vld [vmem:[%s2 + $0x110] sm:$0xff]
  %v261 = vld [vmem:[%s2 + $0x118] sm:$0xff]
  %v262 = vld [vmem:[%s2 + $0x120] sm:$0xff]
  %v263 = vld [vmem:[%s2 + $0x128] sm:$0xff]
  %v264 = vld [vmem:[%s2 + $0x130] sm:$0xff]
  %v265 = vld [vmem:[%s2 + $0x138] sm:$0xff]
  %v266 = vld [vmem:[%s2 + $0x140] sm:$0xff]
  %v267 = vld [vmem:[%s2 + $0x148] sm:$0xff]
  %v268 = vld [vmem:[%s2 + $0x150] sm:$0xff]
  %v269 = vld [vmem:[%s2 + $0x158] sm:$0xff]
  %v270 = vld [vmem:[%s2 + $0x160] sm:$0xff]
  %v271 = vld [vmem:[%s2 + $0x168] sm:$0xff]
  %v272 = vld [vmem:[%s2 + $0x170] sm:$0xff]
  %v273 = vld [vmem:[%s2 + $0x178] sm:$0xff]
  %v274 = vld [vmem:[%s2 + $0x180] sm:$0xff]
  %v275 = vld [vmem:[%s2 + $0x188] sm:$0xff]
  %v276 = vld [vmem:[%s2 + $0x190] sm:$0xff]
  %v277 = vld [vmem:[%s2 + $0x198] sm:$0xff]
  %v278 = vld [vmem:[%s2 + $0x1a0] sm:$0xff]
  %v279 = vld [vmem:[%s2 + $0x1a8] sm:$0xff]
  %v280 = vld [vmem:[%s2 + $0x1b0] sm:$0xff]
  %v281 = vld [vmem:[%s2 + $0x1b8] sm:$0xff]
  %v282 = vld [vmem:[%s2 + $0x1c0] sm:$0xff]
  %v283 = vld [vmem:[%s2 + $0x1c8] sm:$0xff]
  %v284 = vld [vmem:[%s2 + $0x1d0] sm:$0xff]
  %v285 = vld [vmem:[%s2 + $0x1d8] sm:$0xff]
  %v286 = vld [vmem:[%s2 + $0x1e0] sm:$0xff]
  %v287 = vld [vmem:[%s2 + $0x1e8] sm:$0xff]
  %v288 = vld [vmem:[%s2 + $0x1f0] sm:$0xff]
  %v289 = vld [vmem:[%s2 + $0x1f8] sm:$0xff]
  %290 = vmatprep.subr.mxu0 0.0
  %291 = vmatpush1.msra.mxu0 %v209
  %292 = vmatprep.subr.mxu0 0.0
  %293 = vmatpush1.msra.mxu0 %v208
  %294 = vmatprep.subr.mxu0 0.0
  %295 = vmatpush1.msra.mxu0 %v207
  %296 = vmatprep.subr.mxu0 0.0
  %297 = vmatpush1.msra.mxu0 %v206
  %298 = vmatprep.subr.mxu0 0.0
  %299 = vmatpush1.msra.mxu0 %v205
  %300 = vmatprep.subr.mxu0 0.0
  %301 = vmatpush1.msra.mxu0 %v204
  %302 = vmatprep.subr.mxu0 0.0
  %303 = vmatpush1.msra.mxu0 %v203
  %304 = vmatprep.subr.mxu0 0.0
  %305 = vmatpush1.msra.mxu0 %v202
  %306 = vmatprep.subr.mxu0 0.0
  %307 = vmatpush1.msra.mxu0 %v201
  %308 = vmatprep.subr.mxu0 0.0
  %309 = vmatpush1.msra.mxu0 %v200
  %310 = vmatprep.subr.mxu0 0.0
  %311 = vmatpush1.msra.mxu0 %v199
  %312 = vmatprep.subr.mxu0 0.0
  %313 = vmatpush1.msra.mxu0 %v198
  %314 = vmatprep.subr.mxu0 0.0
  %315 = vmatpush1.msra.mxu0 %v197
  %316 = vmatprep.subr.mxu0 0.0
  %317 = vmatpush1.msra.mxu0 %v196
  %318 = vmatprep.subr.mxu0 0.0
  %319 = vmatpush1.msra.mxu0 %v195
  %320 = vmatprep.subr.mxu0 0.0
  %321 = vmatpush1.msra.mxu0 %v194
  %322 = vmatprep.subr.mxu0 0.0
  %323 = vmatpush2.msra.mxu0 %v225
  %324 = vmatprep.subr.mxu0 0.0
  %325 = vmatpush2.msra.mxu0 %v224
  %326 = vmatprep.subr.mxu0 0.0
  %327 = vmatpush2.msra.mxu0 %v223
  %328 = vmatprep.subr.mxu0 0.0
  %329 = vmatpush2.msra.mxu0 %v222
  %330 = vmatprep.subr.mxu0 0.0
  %331 = vmatpush2.msra.mxu0 %v221
  %332 = vmatprep.subr.mxu0 0.0
  %333 = vmatpush2.msra.mxu0 %v220
  %334 = vmatprep.subr.mxu0 0.0
  %335 = vmatpush2.msra.mxu0 %v219
  %336 = vmatprep.subr.mxu0 0.0
  %337 = vmatpush2.msra.mxu0 %v218
  %338 = vmatprep.subr.mxu0 0.0
  %339 = vmatpush2.msra.mxu0 %v217
  %340 = vmatprep.subr.mxu0 0.0
  %341 = vmatpush2.msra.mxu0 %v216
  %342 = vmatprep.subr.mxu0 0.0
  %343 = vmatpush2.msra.mxu0 %v215
  %344 = vmatprep.subr.mxu0 0.0
  %345 = vmatpush2.msra.mxu0 %v214
  %346 = vmatprep.subr.mxu0 0.0
  %347 = vmatpush2.msra.mxu0 %v213
  %348 = vmatprep.subr.mxu0 0.0
  %349 = vmatpush2.msra.mxu0 %v212
  %350 = vmatprep.subr.mxu0 0.0
  %351 = vmatpush2.msra.mxu0 %v211
  %352 = vmatprep.subr.mxu0 0.0
  %353 = vmatpush2.msra.mxu0 %v210
  %354 = vmatprep.mubr.f32.mxu0 %v227
  %355 = vmatmul.mubr.f32.gmra.mxu0 %v226
  %v356 = vpop.f32.mrf.mxu0
  %v357 = vadd.f32 0.0, %v356
  %v358 = vpop.f32.mrf.mxu0
  %359 = vmatprep.mubr.f32.mxu0 %v229
  %360 = vmatmul.mubr.f32.gmra.mxu0 %v228
  %v361 = vpop.f32.mrf.mxu0
  %v362 = vadd.f32 0.0, %v361
  %v363 = vpop.f32.mrf.mxu0
  %364 = vmatprep.mubr.f32.mxu0 %v231
  %365 = vmatmul.mubr.f32.gmra.mxu0 %v230
  %v366 = vpop.f32.mrf.mxu0
  %v367 = vadd.f32 0.0, %v366
  %v368 = vpop.f32.mrf.mxu0
  %369 = vmatprep.mubr.f32.mxu0 %v233
  %370 = vmatmul.mubr.f32.gmra.mxu0 %v232
  %v371 = vpop.f32.mrf.mxu0
  %v372 = vadd.f32 0.0, %v371
  %v373 = vpop.f32.mrf.mxu0
  %374 = vmatprep.mubr.f32.mxu0 %v235
  %375 = vmatmul.mubr.f32.gmra.mxu0 %v234
  %v376 = vpop.f32.mrf.mxu0
  %v377 = vadd.f32 0.0, %v376
  %v378 = vpop.f32.mrf.mxu0
  %379 = vmatprep.mubr.f32.mxu0 %v237
  %380 = vmatmul.mubr.f32.gmra.mxu0 %v236
  %v381 = vpop.f32.mrf.mxu0
  %v382 = vadd.f32 0.0, %v381
  %v383 = vpop.f32.mrf.mxu0
  %384 = vmatprep.mubr.f32.mxu0 %v239
  %385 = vmatmul.mubr.f32.gmra.mxu0 %v238
  %v386 = vpop.f32.mrf.mxu0
  %v387 = vadd.f32 0.0, %v386
  %v388 = vpop.f32.mrf.mxu0
  %389 = vmatprep.mubr.f32.mxu0 %v241
  %390 = vmatmul.mubr.f32.gmra.mxu0 %v240
  %v391 = vpop.f32.mrf.mxu0
  %v392 = vadd.f32 0.0, %v391
  %v393 = vpop.f32.mrf.mxu0
  %394 = vmatprep.mubr.f32.mxu0 %v243
  %395 = vmatmul.mubr.f32.gmra.mxu0 %v242
  %v396 = vpop.f32.mrf.mxu0
  %v397 = vadd.f32 0.0, %v396
  %v398 = vpop.f32.mrf.mxu0
  %399 = vmatprep.mubr.f32.mxu0 %v245
  %400 = vmatmul.mubr.f32.gmra.mxu0 %v244
  %v401 = vpop.f32.mrf.mxu0
  %v402 = vadd.f32 0.0, %v401
  %v403 = vpop.f32.mrf.mxu0
  %404 = vmatprep.mubr.f32.mxu0 %v247
  %405 = vmatmul.mubr.f32.gmra.mxu0 %v246
  %v406 = vpop.f32.mrf.mxu0
  %v407 = vadd.f32 0.0, %v406
  %v408 = vpop.f32.mrf.mxu0
  %409 = vmatprep.mubr.f32.mxu0 %v249
  %410 = vmatmul.mubr.f32.gmra.mxu0 %v248
  %v411 = vpop.f32.mrf.mxu0
  %v412 = vadd.f32 0.0, %v411
  %v413 = vpop.f32.mrf.mxu0
  %414 = vmatprep.mubr.f32.mxu0 %v251
  %415 = vmatmul.mubr.f32.gmra.mxu0 %v250
  %v416 = vpop.f32.mrf.mxu0
  %v417 = vadd.f32 0.0, %v416
  %v418 = vpop.f32.mrf.mxu0
  %419 = vmatprep.mubr.f32.mxu0 %v253
  %420 = vmatmul.mubr.f32.gmra.mxu0 %v252
  %v421 = vpop.f32.mrf.mxu0
  %v422 = vadd.f32 0.0, %v421
  %v423 = vpop.f32.mrf.mxu0
  %424 = vmatprep.mubr.f32.mxu0 %v255
  %425 = vmatmul.mubr.f32.gmra.mxu0 %v254
  %v426 = vpop.f32.mrf.mxu0
  %v427 = vadd.f32 0.0, %v426
  %v428 = vpop.f32.mrf.mxu0
  %429 = vmatprep.mubr.f32.mxu0 %v257
  %430 = vmatmul.mubr.f32.gmra.mxu0 %v256
  %v431 = vpop.f32.mrf.mxu0
  %v432 = vadd.f32 0.0, %v431
  %v433 = vpop.f32.mrf.mxu0
  %434 = vmatprep.mubr.f32.mxu0 %v259
  %435 = vmatmul.mubr.f32.gmra.mxu0 %v258
  %v436 = vpop.f32.mrf.mxu0
  %v437 = vadd.f32 0.0, %v436
  %v438 = vpop.f32.mrf.mxu0
  %439 = vmatprep.mubr.f32.mxu0 %v261
  %440 = vmatmul.mubr.f32.gmra.mxu0 %v260
  %v441 = vpop.f32.mrf.mxu0
  %v442 = vadd.f32 0.0, %v441
  %v443 = vpop.f32.mrf.mxu0
  %444 = vmatprep.mubr.f32.mxu0 %v263
  %445 = vmatmul.mubr.f32.gmra.mxu0 %v262
  %v446 = vpop.f32.mrf.mxu0
  %v447 = vadd.f32 0.0, %v446
  %v448 = vpop.f32.mrf.mxu0
  %449 = vmatprep.mubr.f32.mxu0 %v265
  %450 = vmatmul.mubr.f32.gmra.mxu0 %v264
  %v451 = vpop.f32.mrf.mxu0
  %v452 = vadd.f32 0.0, %v451
  %v453 = vpop.f32.mrf.mxu0
  %454 = vmatprep.mubr.f32.mxu0 %v267
  %455 = vmatmul.mubr.f32.gmra.mxu0 %v266
  %v456 = vpop.f32.mrf.mxu0
  %v457 = vadd.f32 0.0, %v456
  %v458 = vpop.f32.mrf.mxu0
  %459 = vmatprep.mubr.f32.mxu0 %v269
  %460 = vmatmul.mubr.f32.gmra.mxu0 %v268
  %v461 = vpop.f32.mrf.mxu0
  %v462 = vadd.f32 0.0, %v461
  %v463 = vpop.f32.mrf.mxu0
  %464 = vmatprep.mubr.f32.mxu0 %v271
  %465 = vmatmul.mubr.f32.gmra.mxu0 %v270
  %v466 = vpop.f32.mrf.mxu0
  %v467 = vadd.f32 0.0, %v466
  %v468 = vpop.f32.mrf.mxu0
  %469 = vmatprep.mubr.f32.mxu0 %v273
  %470 = vmatmul.mubr.f32.gmra.mxu0 %v272
  %v471 = vpop.f32.mrf.mxu0
  %v472 = vadd.f32 0.0, %v471
  %v473 = vpop.f32.mrf.mxu0
  %474 = vmatprep.mubr.f32.mxu0 %v275
  %475 = vmatmul.mubr.f32.gmra.mxu0 %v274
  %v476 = vpop.f32.mrf.mxu0
  %v477 = vadd.f32 0.0, %v476
  %v478 = vpop.f32.mrf.mxu0
  %479 = vmatprep.mubr.f32.mxu0 %v277
  %480 = vmatmul.mubr.f32.gmra.mxu0 %v276
  %v481 = vpop.f32.mrf.mxu0
  %v482 = vadd.f32 0.0, %v481
  %v483 = vpop.f32.mrf.mxu0
  %484 = vmatprep.mubr.f32.mxu0 %v279
  %485 = vmatmul.mubr.f32.gmra.mxu0 %v278
  %v486 = vpop.f32.mrf.mxu0
  %v487 = vadd.f32 0.0, %v486
  %v488 = vpop.f32.mrf.mxu0
  %489 = vmatprep.mubr.f32.mxu0 %v281
  %490 = vmatmul.mubr.f32.gmra.mxu0 %v280
  %v491 = vpop.f32.mrf.mxu0
  %v492 = vadd.f32 0.0, %v491
  %v493 = vpop.f32.mrf.mxu0
  %494 = vmatprep.mubr.f32.mxu0 %v283
  %495 = vmatmul.mubr.f32.gmra.mxu0 %v282
  %v496 = vpop.f32.mrf.mxu0
  %v497 = vadd.f32 0.0, %v496
  %v498 = vpop.f32.mrf.mxu0
  %499 = vmatprep.mubr.f32.mxu0 %v285
  %500 = vmatmul.mubr.f32.gmra.mxu0 %v284
  %v501 = vpop.f32.mrf.mxu0
  %v502 = vadd.f32 0.0, %v501
  %v503 = vpop.f32.mrf.mxu0
  %504 = vmatprep.mubr.f32.mxu0 %v287
  %505 = vmatmul.mubr.f32.gmra.mxu0 %v286
  %v506 = vpop.f32.mrf.mxu0
  %v507 = vadd.f32 0.0, %v506
  %v508 = vpop.f32.mrf.mxu0
  %509 = vmatprep.mubr.f32.mxu0 %v289
  %510 = vmatmul.mubr.f32.gmra.mxu0 %v288
  %v511 = vpop.f32.mrf.mxu0
  %v512 = vadd.f32 0.0, %v511
  %v513 = vpop.f32.mrf.mxu0
  %514 = vdwg.mxu0
  %v515 = vmul.f32 %v357, %v437
  %v516 = vmul.f32 %v362, %v442
  %v517 = vmul.f32 %v367, %v447
  %v518 = vmul.f32 %v372, %v452
  %v519 = vmul.f32 %v377, %v457
  %v520 = vmul.f32 %v382, %v462
  %v521 = vmul.f32 %v387, %v467
  %v522 = vmul.f32 %v392, %v472
  %v523 = vmul.f32 %v397, %v477
  %v524 = vmul.f32 %v402, %v482
  %v525 = vmul.f32 %v407, %v487
  %v526 = vmul.f32 %v412, %v492
  %v527 = vmul.f32 %v417, %v497
  %v528 = vmul.f32 %v422, %v502
  %v529 = vmul.f32 %v427, %v507
  %v530 = vmul.f32 %v432, %v512
  %v531 = vadd.f32 %v515, %v516
  %v532 = vadd.f32 %v531, %v517
  %v533 = vadd.f32 %v532, %v518
  %v534 = vadd.f32 %v533, %v519
  %v535 = vadd.f32 %v534, %v520
  %v536 = vadd.f32 %v535, %v521
  %v537 = vadd.f32 %v536, %v522
  %v538 = vadd.f32 %v537, %v523
  %v539 = vadd.f32 %v538, %v524
  %v540 = vadd.f32 %v539, %v525
  %v541 = vadd.f32 %v540, %v526
  %v542 = vadd.f32 %v541, %v527
  %v543 = vadd.f32 %v542, %v528
  %v544 = vadd.f32 %v543, %v529
  %v545 = vadd.f32 %v544, %v530
  %v546 = vrot.slane %v545, 4
  %v547 = vadd.f32 %v545, %v546
  %v548 = vrot.slane %v547, 2
  %v549 = vadd.f32 %v547, %v548
  %v550 = vrot.slane %v549, 1
  %v551 = vadd.f32 %v549, %v550
  %s552 = sld [smem:[#allocation2]]
  %v553 = vstv %s552
  %v554 = vmul.f32 %v551, %v553
  %s555 = sld [smem:[#allocation3]]
  %v556 = vstv %s555
  %v557 = vadd.f32 %v554, %v556
  %v558 = vxor.u32 %v557, 2147483648
  %v559 = vmul.f32 %v558, 1.442695
  %v560 = vpow.pop %v559
  %v561 = vadd.f32 %v560, 1.0
  %v562 = vrcp.pop %v561
  %v563 = vmul.f32 1.0, %v562
  %564 = vst [vmem:[%s5] sm:$0x1] %v563
  // Predicated region
  $region22: #{movie_genre_embedding_forward.1} parent=0 // pred_check
    _
  $region23: #{movie_genre_embedding_forward.1} parent=0 // pred_check_branch
    %566 = sbr.rel (0) target = $region25
  $region24: #{movie_genre_embedding_forward.1} parent=0 // pred_region
    _
  $region25: #{movie_genre_embedding_forward.1} parent=0 // pred_fallthru
    _
  // Predicated region
  $region26: #{movie_genre_embedding_forward.1} parent=0 // pred_check
    _
  $region27: #{movie_genre_embedding_forward.1} parent=0 // pred_check_branch
    %568 = sbr.rel (0) target = $region29
  $region28: #{movie_genre_embedding_forward.1} parent=0 // pred_region
    _
  $region29: #{movie_genre_embedding_forward.1} parent=0 // pred_fallthru
    _

</llo_original>
